<compile_context>
chip_gen: v7x
topology: tpu7x:2x2x1
jax: 0.10.0
libtpu: 0.0.40
codegen_flags: <defaults>
</compile_context>

<pallas_src>
import functools
import numpy as np

import jax
import jax.numpy as jnp
from jax.experimental import pallas as pl
from jax.experimental.pallas import tpu as pltpu  # noqa: F401  (imported per project convention)


# ----------------------------- config -------------------------------------
CFG = {
    "MAX_SIZE": 128,
    "RPN_FEAT_STRIDE": 16,
    "ANCHOR_SCALES": [1, 2],
    "TRAIN.RPN_NEGATIVE_OVERLAP": 0.3,
    "TRAIN.RPN_POSITIVE_OVERLAP": 0.7,
    "TRAIN.RPN_FG_FRACTION": 0.5,
    "TRAIN.RPN_BATCHSIZE": 32,
}

N_ROWS = 16       # anchor-invariant slab rows (sublane aligned)
N_OUT_ROWS = 16   # output slab rows: 1 label + 4 bbox + 5 ellipse + 6 pad
GT_COLS = 16      # matched-GT column slab: 4 box + 8 ellipse + 4 pad

# anchor slab row indices
_AX1, _AY1, _AX2, _AY2 = 0, 1, 2, 3
_AW, _AH, _INV_AW, _INV_AH = 4, 5, 6, 7
_LOG_AW, _LOG_AH, _CX, _CY = 8, 9, 10, 11
_AREA, _VALID = 12, 13


# -------------------- anchor generation (host-side numpy) ------------------
# Standard py-faster-rcnn generate_anchors (source not provided in the module,
# standard implementation used).
def _whctrs(anchor):
    w = anchor[2] - anchor[0] + 1
    h = anchor[3] - anchor[1] + 1
    x_ctr = anchor[0] + 0.5 * (w - 1)
    y_ctr = anchor[1] + 0.5 * (h - 1)
    return w, h, x_ctr, y_ctr


def _mkanchors(ws, hs, x_ctr, y_ctr):
    ws = ws[:, np.newaxis]
    hs = hs[:, np.newaxis]
    return np.hstack(
        (x_ctr - 0.5 * (ws - 1), y_ctr - 0.5 * (hs - 1),
         x_ctr + 0.5 * (ws - 1), y_ctr + 0.5 * (hs - 1)))


def _ratio_enum(anchor, ratios):
    w, h, x_ctr, y_ctr = _whctrs(anchor)
    size = w * h
    size_ratios = size / ratios
    ws = np.round(np.sqrt(size_ratios))
    hs = np.round(ws * ratios)
    return _mkanchors(ws, hs, x_ctr, y_ctr)


def _scale_enum(anchor, scales):
    w, h, x_ctr, y_ctr = _whctrs(anchor)
    ws = w * scales
    hs = h * scales
    return _mkanchors(ws, hs, x_ctr, y_ctr)


def generate_anchors(base_size=16, ratios=(1,), scales=np.array([8], np.float32)):
    base_anchor = np.array([1, 1, base_size, base_size], dtype=np.float32) - 1
    ratio_anchors = _ratio_enum(base_anchor, np.array(ratios, dtype=np.float32))
    anchors = np.vstack(
        [_scale_enum(ratio_anchors[i, :], scales) for i in range(ratio_anchors.shape[0])])
    return anchors.astype(np.float32)


def preprocess(cfg):
    """Mirrors EllipseTargetLayer._preprocess, but precomputes every anchor-only
    invariant host-side and ships them as a lane-dense (1, 16, N_pad) slab.
    The inside/outside test becomes a mask row, so no inds_inside / _unmap."""
    allowed_border = 0
    im_info = (cfg["MAX_SIZE"], cfg["MAX_SIZE"])
    base_anchors = generate_anchors(
        base_size=cfg["RPN_FEAT_STRIDE"], ratios=[1],
        scales=np.array(cfg["ANCHOR_SCALES"], dtype=np.float32))
    A = base_anchors.shape[0]
    feat_stride = cfg["RPN_FEAT_STRIDE"]
    feat_width = cfg["MAX_SIZE"] // cfg["RPN_FEAT_STRIDE"]
    feat_height = feat_width
    shift_x = np.arange(0, feat_width) * feat_stride
    shift_y = np.arange(0, feat_height) * feat_stride
    shift_x, shift_y = np.meshgrid(shift_x, shift_y)
    shifts = np.vstack((shift_x.ravel(), shift_y.ravel(),
                        shift_x.ravel(), shift_y.ravel())).transpose()
    K = shifts.shape[0]
    all_anchors = (base_anchors.reshape((1, A, 4)) +
                   shifts.reshape((1, K, 4)).transpose((1, 0, 2))).reshape((K * A, 4))
    total_anchors = int(K * A)

    inside = ((all_anchors[:, 0] >= -allowed_border) &
              (all_anchors[:, 1] >= -allowed_border) &
              (all_anchors[:, 2] < im_info[1] + allowed_border) &
              (all_anchors[:, 3] < im_info[0] + allowed_border)).astype(np.float32)

    # Pad anchor count to a lane multiple with degenerate [0,0,0,0] anchors marked
    # invalid (for MAX_SIZE=128/stride=16/2 scales total_anchors is already 128, so
    # no padding actually happens and no wrapper slice is needed).
    n_pad = max(128, int(np.ceil(total_anchors / 128.0)) * 128)
    x1 = np.zeros(n_pad, np.float32)
    y1 = np.zeros(n_pad, np.float32)
    x2 = np.zeros(n_pad, np.float32)
    y2 = np.zeros(n_pad, np.float32)
    valid = np.zeros(n_pad, np.float32)
    x1[:total_anchors] = all_anchors[:, 0]
    y1[:total_anchors] = all_anchors[:, 1]
    x2[:total_anchors] = all_anchors[:, 2]
    y2[:total_anchors] = all_anchors[:, 3]
    valid[:total_anchors] = inside

    w = x2 - x1 + 1.0          # padded anchors -> w = h = 1 (all invariants finite)
    h = y2 - y1 + 1.0
    rows = np.zeros((N_ROWS, n_pad), np.float32)
    rows[_AX1], rows[_AY1], rows[_AX2], rows[_AY2] = x1, y1, x2, y2
    rows[_AW], rows[_AH] = w, h
    rows[_INV_AW], rows[_INV_AH] = 1.0 / w, 1.0 / h
    rows[_LOG_AW], rows[_LOG_AH] = np.log(w), np.log(h)
    rows[_CX], rows[_CY] = x1 + 0.5 * w, y1 + 0.5 * h
    rows[_AREA] = w * h
    rows[_VALID] = valid
    anchors_rows = rows[np.newaxis]                     # (1, N_ROWS, n_pad)

    return dict(A=A, feat_height=feat_height, feat_width=feat_width,
                total_anchors=total_anchors, n_pad=n_pad,
                anchors_rows=anchors_rows)


# ------------------------------ Pallas kernel ------------------------------
def ellipse_target_kernel(anchors_ref, gt_boxes_ref, gt_cols_ref, out_ref,
                          *, neg_thresh, pos_thresh):
    a = anchors_ref[...]            # (1, 16, N)   anchor invariants, lane-dense
    gt = gt_boxes_ref[...]          # (B, G, 5)    [x1,y1,x2,y2,cls]
    gt_cols = gt_cols_ref[...]      # (B, 16, G)   [box(4) | ellipse(8) | pad(4)]
    N = a.shape[2]
    B, G, _ = gt.shape

    def arow(r):                    # (1, 1, N)
        return a[:, r:r + 1, :]

    ax1, ay1, ax2, ay2 = arow(_AX1), arow(_AY1), arow(_AX2), arow(_AY2)
    inv_aw, inv_ah = arow(_INV_AW), arow(_INV_AH)
    log_aw, log_ah = arow(_LOG_AW), arow(_LOG_AH)
    ex_cx, ex_cy = arow(_CX), arow(_CY)
    anchor_area = arow(_AREA)
    vmask = arow(_VALID) > 0.0      # inside & non-degenerate anchors

    gx1 = gt[:, :, 0:1]
    gy1 = gt[:, :, 1:2]
    gx2 = gt[:, :, 2:3]
    gy2 = gt[:, :, 3:4]             # (B, G, 1)

    # --- bbox_overlaps_batch, laid out (B, G, N) with anchors on lanes ---
    gw = gx2 - gx1 + 1.0
    gh = gy2 - gy1 + 1.0
    gt_area = gw * gh
    gt_zero = jnp.logical_and(gw == 1.0, gh == 1.0)                # (B, G, 1)

    iw = jnp.minimum(ax2, gx2) - jnp.maximum(ax1, gx1) + 1.0       # (B, G, N)
    ih = jnp.minimum(ay2, gy2) - jnp.maximum(ay1, gy1) + 1.0
    inter = jnp.maximum(iw, 0.0) * jnp.maximum(ih, 0.0)
    ua = anchor_area + gt_area - inter
    overlaps = inter / ua                     # exact divide: feeds label thresholds
    overlaps = jnp.where(gt_zero, 0.0, overlaps)
    overlaps = jnp.where(vmask, overlaps, -1.0)   # outside / padded anchors

    # --- per-anchor max/argmax (sublane reductions), per-GT max (lane reduction) ---
    max_ov = jnp.max(overlaps, axis=1, keepdims=True)              # (B, 1, N)
    row_idx = jax.lax.broadcasted_iota(jnp.int32, (B, G, N), 1)
    argmax_ov = jnp.min(jnp.where(overlaps == max_ov, row_idx, G),
                        axis=1, keepdims=True)                     # first-index ties

    gt_max = jnp.max(overlaps, axis=2, keepdims=True)              # (B, G, 1)
    gt_max = jnp.where(gt_max == 0.0, 1e-5, gt_max)
    keep = jnp.sum((overlaps == gt_max).astype(jnp.float32),
                   axis=1, keepdims=True)                          # (B, 1, N)

    # --- labels ---
    labels = jnp.full((B, 1, N), -1.0, dtype=jnp.float32)
    labels = jnp.where(max_ov < neg_thresh, 0.0, labels)
    labels = jnp.where(keep > 0.0, 1.0, labels)   # `if sum(keep)>0` is a no-op guard
    labels = jnp.where(max_ov >= pos_thresh, 1.0, labels)
    labels = jnp.where(vmask, labels, -1.0)       # outside anchors: _unmap fill (-1)

    # --- matched-GT gather on the MXU: (B,16,G) @ onehot(B,G,N) -> (B,16,N) ---
    onehot = (row_idx == argmax_ov).astype(jnp.float32)            # (B, G, N)
    matched = jax.lax.dot_general(
        gt_cols, onehot,
        dimension_numbers=(((2,), (1,)), ((0,), (0,))),
        preferred_element_type=jnp.float32)                        # (B, 16, N)

    def mrow(r):                                                   # (B, 1, N)
        return matched[:, r:r + 1, :]

    mgx1, mgy1, mgx2, mgy2 = mrow(0), mrow(1), mrow(2), mrow(3)
    p1x, p1y, p2x, p2y = mrow(4), mrow(5), mrow(6), mrow(7)
    p3x, p3y, p4x, p4y = mrow(8), mrow(9), mrow(10), mrow(11)

    # --- bbox_transform (anchor invariants 1/w, log w, centers precomputed) ---
    bw = mgx2 - mgx1 + 1.0
    bh = mgy2 - mgy1 + 1.0
    bcx = mgx1 + 0.5 * bw
    bcy = mgy1 + 0.5 * bh
    tdx = (bcx - ex_cx) * inv_aw
    tdy = (bcy - ex_cy) * inv_ah
    tdw = jnp.log(bw) - log_aw
    tdh = jnp.log(bh) - log_ah

    # --- ellipse_transform ---
    # TODO(synk): ellipse_transform source not provided; using a standard 5-param
    # parameterization from 4 axis endpoints (dcx, dcy, log major, log minor, sin(theta)).
    ecx = 0.5 * (p1x + p2x)
    ecy = 0.5 * (p1y + p2y)
    maj = jnp.sqrt((p2x - p1x) ** 2 + (p2y - p1y) ** 2)            # major-axis length
    mnr = jnp.sqrt((p4x - p3x) ** 2 + (p4y - p3y) ** 2)            # minor-axis length
    edx = (ecx - ex_cx) * inv_aw
    edy = (ecy - ex_cy) * inv_ah
    eda = jnp.log(jnp.maximum(maj, 1e-6)) - log_aw
    edb = jnp.log(jnp.maximum(mnr, 1e-6)) - log_ah
    sin_t = (p2y - p1y) * pl.reciprocal(maj + 1e-6, approx=True)   # EUP slot

    def msk(x):                      # outside / padded anchors: _unmap fill (0)
        return jnp.where(vmask, x, 0.0)

    # --- direct row-slice stores into the lane-dense (B, 16, N) output slab ---
    out_ref[:, 0:1, :] = labels
    out_ref[:, 1:2, :] = msk(tdx)
    out_ref[:, 2:3, :] = msk(tdy)
    out_ref[:, 3:4, :] = msk(tdw)
    out_ref[:, 4:5, :] = msk(tdh)
    out_ref[:, 5:6, :] = msk(edx)
    out_ref[:, 6:7, :] = msk(edy)
    out_ref[:, 7:8, :] = msk(eda)
    out_ref[:, 8:9, :] = msk(edb)
    out_ref[:, 9:10, :] = msk(sin_t)
    out_ref[:, 10:N_OUT_ROWS, :] = jnp.zeros((B, N_OUT_ROWS - 10, N), jnp.float32)


def ellipse_target_pallas(anchors_rows, gt_boxes, gt_cols, cfg):
    """Single pallas_call invocation (no grid) over the whole batch.

    All operands are a few KB and live fully in VMEM; collapsing the old grid=(B,)
    removes the per-step pipeline overhead and per-step GT DMAs that dominated
    wall-clock at these sizes (identical conclusion on v5e / v6e / v7x)."""
    B = gt_boxes.shape[0]
    n_pad = anchors_rows.shape[-1]
    kernel = functools.partial(
        ellipse_target_kernel,
        neg_thresh=float(cfg["TRAIN.RPN_NEGATIVE_OVERLAP"]),
        pos_thresh=float(cfg["TRAIN.RPN_POSITIVE_OVERLAP"]))
    return pl.pallas_call(
        kernel,
        out_shape=jax.ShapeDtypeStruct((B, N_OUT_ROWS, n_pad), jnp.float32),
    )(anchors_rows, gt_boxes, gt_cols)


# --------------------------- plain-JAX glue ---------------------------------
def subsample_labels(labels, key, num_fg_max, rpn_batchsize):
    """Random fg/bg disabling via top-k priority thresholds.
    TODO(synk): reference uses torch.nonzero + np.random.permutation (data-dependent
    shapes); reproduced with jax.random + lax.top_k — distributionally equivalent,
    not bit-identical RNG."""
    B, N = labels.shape
    keys = jax.random.split(key, B)

    def one(lab, k):
        k1, k2 = jax.random.split(k)
        # foreground: keep at most num_fg_max of the label==1 anchors
        fg = lab == 1.0
        sum_fg = jnp.sum(fg.astype(jnp.int32))
        pri = jnp.where(fg, jax.random.uniform(k1, (N,)), -1.0)
        fg_thresh = jax.lax.top_k(pri, num_fg_max)[0][num_fg_max - 1]
        disable_fg = fg & (pri < fg_thresh) & (sum_fg > num_fg_max)
        lab = jnp.where(disable_fg, -1.0, lab)

        # background: keep at most (RPN_BATCHSIZE - #fg) of the label==0 anchors
        num_bg = rpn_batchsize - jnp.sum((lab == 1.0).astype(jnp.int32))
        bg = lab == 0.0
        sum_bg = jnp.sum(bg.astype(jnp.int32))
        pri2 = jnp.where(bg, jax.random.uniform(k2, (N,)), -1.0)
        top_bg = jax.lax.top_k(pri2, rpn_batchsize)[0]
        bg_thresh = top_bg[jnp.clip(num_bg - 1, 0, rpn_batchsize - 1)]
        disable_bg = bg & (pri2 < bg_thresh) & (sum_bg > num_bg)
        lab = jnp.where(disable_bg, -1.0, lab)
        return lab

    return jax.vmap(one)(labels, keys)


def ellipse_target_forward(gt_boxes, gt_ellipses, cfg, meta, key):
    anchors_rows = jnp.asarray(meta["anchors_rows"])            # (1, 16, n_pad)
    B, G, _ = gt_boxes.shape

    # Merged GT column slab for the in-kernel MXU gather: (B, 16, G).
    gt_cols = jnp.concatenate(
        [jnp.transpose(gt_boxes[..., :4].astype(jnp.float32), (0, 2, 1)),
         jnp.transpose(gt_ellipses[..., :8].astype(jnp.float32), (0, 2, 1)),
         jnp.zeros((B, GT_COLS - 12, G), jnp.float32)], axis=1)

    slab = ellipse_target_pallas(anchors_rows, gt_boxes.astype(jnp.float32),
                                 gt_cols, cfg)                  # (B, 16, n_pad)

    total = meta["total_anchors"]
    if meta["n_pad"] != total:        # only for configs where K*A isn't lane aligned
        slab = slab[:, :, :total]

    labels = slab[:, 0, :]                                      # (B, total)
    bbox_t = jnp.transpose(slab[:, 1:5, :], (0, 2, 1))          # (B, total, 4)
    ell_t = jnp.transpose(slab[:, 5:10, :], (0, 2, 1))          # (B, total, 5)

    num_fg = int(cfg["TRAIN.RPN_FG_FRACTION"] * cfg["TRAIN.RPN_BATCHSIZE"])
    labels = subsample_labels(labels, key, num_fg, cfg["TRAIN.RPN_BATCHSIZE"])

    # Outside anchors already carry the _unmap fill values (-1 label, 0 deltas)
    # straight from the kernel, so no scatter / unmap is needed — reshape directly.
    H, W, A = meta["feat_height"], meta["feat_width"], meta["A"]
    labels_out = labels.reshape(B, H, W, A, 1)
    bbox_out = bbox_t.reshape(B, H, W, A, 4)
    ell_out = ell_t.reshape(B, H, W, A, 5)
    return labels_out, bbox_out, ell_out


# ------------------------------- main ---------------------------------------
if __name__ == "__main__":
    meta = preprocess(CFG)

    B, G = 2, 8
    key = jax.random.PRNGKey(0)
    k1, k2, k3, k4, ksub = jax.random.split(key, 5)

    # deterministic synthetic GT boxes (x1,y1,x2,y2,cls)
    cx = jax.random.uniform(k1, (B, G), minval=16.0, maxval=112.0)
    cy = jax.random.uniform(k2, (B, G), minval=16.0, maxval=112.0)
    half = jax.random.uniform(k3, (B, G), minval=6.0, maxval=30.0)
    gt_boxes = jnp.stack(
        [cx - half, cy - half, cx + half, cy + half, jnp.ones((B, G))],
        axis=-1).astype(jnp.float32)                            # (B, G, 5)

    # deterministic synthetic GT ellipses: major/minor axis endpoint pairs (8 vals)
    theta = jax.random.uniform(k4, (B, G), minval=0.0, maxval=np.pi)
    a = half
    b = 0.6 * half
    gt_ellipses = jnp.stack(
        [cx - a * jnp.cos(theta), cy - a * jnp.sin(theta),
         cx + a * jnp.cos(theta), cy + a * jnp.sin(theta),
         cx + b * jnp.sin(theta), cy - b * jnp.cos(theta),
         cx - b * jnp.sin(theta), cy + b * jnp.cos(theta)],
        axis=-1).astype(jnp.float32)                            # (B, G, 8)

    labels, bbox_targets, ellipse_targets = ellipse_target_forward(
        gt_boxes, gt_ellipses, CFG, meta, ksub)

    jax.block_until_ready((labels, bbox_targets, ellipse_targets))
    assert labels.shape == (B, meta["feat_height"], meta["feat_width"], meta["A"], 1)
    assert bbox_targets.shape == (B, meta["feat_height"], meta["feat_width"], meta["A"], 4)
    assert ellipse_targets.shape == (B, meta["feat_height"], meta["feat_width"], meta["A"], 5)
    assert bool(jnp.all(jnp.isfinite(bbox_targets)))
    assert bool(jnp.all(jnp.isfinite(ellipse_targets)))
    print("KERNEL_OK")
</pallas_src>

<mosaic_0001>
module attributes {stable_mosaic.version = 11 : i64} {
  func.func @ellipse_target_kernel(%arg0: memref<1x16x128xf32, #tpu.memory_space<vmem>>, %arg1: memref<2x8x5xf32, #tpu.memory_space<vmem>>, %arg2: memref<2x16x8xf32, #tpu.memory_space<vmem>>, %arg3: memref<2x16x128xf32, #tpu.memory_space<vmem>>) attributes {dimension_semantics = [], scalar_prefetch = 0 : i64, scratch_operands = 0 : i64, tpu.core_type = #tpu.core_type<tc>} {
    %c0 = arith.constant 0 : index
    %c0_0 = arith.constant 0 : index
    %c0_1 = arith.constant 0 : index
    %0 = vector.load %arg0[%c0, %c0_0, %c0_1] : memref<1x16x128xf32, #tpu.memory_space<vmem>>, vector<1x16x128xf32>
    %c0_2 = arith.constant 0 : index
    %c0_3 = arith.constant 0 : index
    %c0_4 = arith.constant 0 : index
    %1 = vector.load %arg1[%c0_2, %c0_3, %c0_4] : memref<2x8x5xf32, #tpu.memory_space<vmem>>, vector<2x8x5xf32>
    %c0_5 = arith.constant 0 : index
    %c0_6 = arith.constant 0 : index
    %c0_7 = arith.constant 0 : index
    %2 = vector.load %arg2[%c0_5, %c0_6, %c0_7] : memref<2x16x8xf32, #tpu.memory_space<vmem>>, vector<2x16x8xf32>
    %3 = vector.extract_strided_slice %0 {offsets = [0, 0, 0], sizes = [1, 1, 128], strides = [1, 1, 1]} : vector<1x16x128xf32> to vector<1x1x128xf32>
    %4 = vector.extract_strided_slice %0 {offsets = [0, 1, 0], sizes = [1, 1, 128], strides = [1, 1, 1]} : vector<1x16x128xf32> to vector<1x1x128xf32>
    %5 = vector.extract_strided_slice %0 {offsets = [0, 2, 0], sizes = [1, 1, 128], strides = [1, 1, 1]} : vector<1x16x128xf32> to vector<1x1x128xf32>
    %6 = vector.extract_strided_slice %0 {offsets = [0, 3, 0], sizes = [1, 1, 128], strides = [1, 1, 1]} : vector<1x16x128xf32> to vector<1x1x128xf32>
    %7 = vector.extract_strided_slice %0 {offsets = [0, 6, 0], sizes = [1, 1, 128], strides = [1, 1, 1]} : vector<1x16x128xf32> to vector<1x1x128xf32>
    %8 = vector.extract_strided_slice %0 {offsets = [0, 7, 0], sizes = [1, 1, 128], strides = [1, 1, 1]} : vector<1x16x128xf32> to vector<1x1x128xf32>
    %9 = vector.extract_strided_slice %0 {offsets = [0, 8, 0], sizes = [1, 1, 128], strides = [1, 1, 1]} : vector<1x16x128xf32> to vector<1x1x128xf32>
    %10 = vector.extract_strided_slice %0 {offsets = [0, 9, 0], sizes = [1, 1, 128], strides = [1, 1, 1]} : vector<1x16x128xf32> to vector<1x1x128xf32>
    %11 = vector.extract_strided_slice %0 {offsets = [0, 10, 0], sizes = [1, 1, 128], strides = [1, 1, 1]} : vector<1x16x128xf32> to vector<1x1x128xf32>
    %12 = vector.extract_strided_slice %0 {offsets = [0, 11, 0], sizes = [1, 1, 128], strides = [1, 1, 1]} : vector<1x16x128xf32> to vector<1x1x128xf32>
    %13 = vector.extract_strided_slice %0 {offsets = [0, 12, 0], sizes = [1, 1, 128], strides = [1, 1, 1]} : vector<1x16x128xf32> to vector<1x1x128xf32>
    %14 = vector.extract_strided_slice %0 {offsets = [0, 13, 0], sizes = [1, 1, 128], strides = [1, 1, 1]} : vector<1x16x128xf32> to vector<1x1x128xf32>
    %cst = arith.constant 0.000000e+00 : f32
    %15 = vector.broadcast %cst : f32 to vector<1x1x128xf32>
    %16 = arith.cmpf ogt, %14, %15 : vector<1x1x128xf32>
    %17 = vector.extract_strided_slice %1 {offsets = [0, 0, 0], sizes = [2, 8, 1], strides = [1, 1, 1]} : vector<2x8x5xf32> to vector<2x8x1xf32>
    %18 = vector.extract_strided_slice %1 {offsets = [0, 0, 1], sizes = [2, 8, 1], strides = [1, 1, 1]} : vector<2x8x5xf32> to vector<2x8x1xf32>
    %19 = vector.extract_strided_slice %1 {offsets = [0, 0, 2], sizes = [2, 8, 1], strides = [1, 1, 1]} : vector<2x8x5xf32> to vector<2x8x1xf32>
    %20 = vector.extract_strided_slice %1 {offsets = [0, 0, 3], sizes = [2, 8, 1], strides = [1, 1, 1]} : vector<2x8x5xf32> to vector<2x8x1xf32>
    %21 = arith.subf %19, %17 : vector<2x8x1xf32>
    %cst_8 = arith.constant 1.000000e+00 : f32
    %22 = vector.broadcast %cst_8 : f32 to vector<2x8x1xf32>
    %23 = arith.addf %21, %22 : vector<2x8x1xf32>
    %24 = arith.subf %20, %18 : vector<2x8x1xf32>
    %cst_9 = arith.constant 1.000000e+00 : f32
    %25 = vector.broadcast %cst_9 : f32 to vector<2x8x1xf32>
    %26 = arith.addf %24, %25 : vector<2x8x1xf32>
    %27 = arith.mulf %23, %26 : vector<2x8x1xf32>
    %cst_10 = arith.constant 1.000000e+00 : f32
    %28 = vector.broadcast %cst_10 : f32 to vector<2x8x1xf32>
    %29 = arith.cmpf oeq, %23, %28 : vector<2x8x1xf32>
    %cst_11 = arith.constant 1.000000e+00 : f32
    %30 = vector.broadcast %cst_11 : f32 to vector<2x8x1xf32>
    %31 = arith.cmpf oeq, %26, %30 : vector<2x8x1xf32>
    %32 = arith.andi %29, %31 : vector<2x8x1xi1>
    %33 = vector.broadcast %5 : vector<1x1x128xf32> to vector<2x8x128xf32>
    %34 = vector.broadcast %19 : vector<2x8x1xf32> to vector<2x8x128xf32>
    %35 = arith.minimumf %33, %34 : vector<2x8x128xf32>
    %36 = vector.broadcast %3 : vector<1x1x128xf32> to vector<2x8x128xf32>
    %37 = vector.broadcast %17 : vector<2x8x1xf32> to vector<2x8x128xf32>
    %38 = arith.maximumf %36, %37 : vector<2x8x128xf32>
    %39 = arith.subf %35, %38 : vector<2x8x128xf32>
    %cst_12 = arith.constant 1.000000e+00 : f32
    %40 = vector.broadcast %cst_12 : f32 to vector<2x8x128xf32>
    %41 = arith.addf %39, %40 : vector<2x8x128xf32>
    %42 = vector.broadcast %6 : vector<1x1x128xf32> to vector<2x8x128xf32>
    %43 = vector.broadcast %20 : vector<2x8x1xf32> to vector<2x8x128xf32>
    %44 = arith.minimumf %42, %43 : vector<2x8x128xf32>
    %45 = vector.broadcast %4 : vector<1x1x128xf32> to vector<2x8x128xf32>
    %46 = vector.broadcast %18 : vector<2x8x1xf32> to vector<2x8x128xf32>
    %47 = arith.maximumf %45, %46 : vector<2x8x128xf32>
    %48 = arith.subf %44, %47 : vector<2x8x128xf32>
    %cst_13 = arith.constant 1.000000e+00 : f32
    %49 = vector.broadcast %cst_13 : f32 to vector<2x8x128xf32>
    %50 = arith.addf %48, %49 : vector<2x8x128xf32>
    %cst_14 = arith.constant 0.000000e+00 : f32
    %51 = vector.broadcast %cst_14 : f32 to vector<2x8x128xf32>
    %52 = arith.maximumf %41, %51 : vector<2x8x128xf32>
    %cst_15 = arith.constant 0.000000e+00 : f32
    %53 = vector.broadcast %cst_15 : f32 to vector<2x8x128xf32>
    %54 = arith.maximumf %50, %53 : vector<2x8x128xf32>
    %55 = arith.mulf %52, %54 : vector<2x8x128xf32>
    %56 = vector.broadcast %13 : vector<1x1x128xf32> to vector<2x8x128xf32>
    %57 = vector.broadcast %27 : vector<2x8x1xf32> to vector<2x8x128xf32>
    %58 = arith.addf %56, %57 : vector<2x8x128xf32>
    %59 = arith.subf %58, %55 : vector<2x8x128xf32>
    %60 = arith.divf %55, %59 : vector<2x8x128xf32>
    %cst_16 = arith.constant 0.000000e+00 : f32
    %61 = vector.shape_cast %32 : vector<2x8x1xi1> to vector<2x8x1xi1>
    %62 = vector.broadcast %61 : vector<2x8x1xi1> to vector<2x8x128xi1>
    %63 = vector.broadcast %cst_16 : f32 to vector<2x8x128xf32>
    %64 = arith.select %62, %63, %60 : vector<2x8x128xi1>, vector<2x8x128xf32>
    %cst_17 = arith.constant -1.000000e+00 : f32
    %65 = vector.shape_cast %16 : vector<1x1x128xi1> to vector<1x1x128xi1>
    %66 = vector.broadcast %65 : vector<1x1x128xi1> to vector<2x8x128xi1>
    %67 = vector.broadcast %cst_17 : f32 to vector<2x8x128xf32>
    %68 = arith.select %66, %64, %67 : vector<2x8x128xi1>, vector<2x8x128xf32>
    %cst_18 = arith.constant dense<0xFF800000> : vector<2x128xf32>
    %69 = vector.multi_reduction <maximumf>, %68, %cst_18 [1] : vector<2x8x128xf32> to vector<2x128xf32>
    %70 = vector.shape_cast %69 : vector<2x128xf32> to vector<2x1x128xf32>
    %71 = tpu.iota {dimensions = array<i32: 1>} : vector<2x8x128xi32>
    %72 = vector.broadcast %70 : vector<2x1x128xf32> to vector<2x8x128xf32>
    %73 = arith.cmpf oeq, %68, %72 : vector<2x8x128xf32>
    %c8_i32 = arith.constant 8 : i32
    %74 = vector.broadcast %c8_i32 : i32 to vector<2x8x128xi32>
    %75 = arith.select %73, %71, %74 : vector<2x8x128xi1>, vector<2x8x128xi32>
    %cst_19 = arith.constant dense<2147483647> : vector<2x128xi32>
    %76 = vector.multi_reduction <minsi>, %75, %cst_19 [1] : vector<2x8x128xi32> to vector<2x128xi32>
    %77 = vector.shape_cast %76 : vector<2x128xi32> to vector<2x1x128xi32>
    %cst_20 = arith.constant dense<0xFF800000> : vector<2x8xf32>
    %78 = vector.multi_reduction <maximumf>, %68, %cst_20 [2] : vector<2x8x128xf32> to vector<2x8xf32>
    %79 = vector.shape_cast %78 : vector<2x8xf32> to vector<2x8x1xf32>
    %cst_21 = arith.constant 0.000000e+00 : f32
    %80 = vector.broadcast %cst_21 : f32 to vector<2x8x1xf32>
    %81 = arith.cmpf oeq, %79, %80 : vector<2x8x1xf32>
    %cst_22 = arith.constant 9.99999974E-6 : f32
    %82 = vector.broadcast %cst_22 : f32 to vector<2x8x1xf32>
    %83 = arith.select %81, %82, %79 : vector<2x8x1xi1>, vector<2x8x1xf32>
    %84 = vector.broadcast %83 : vector<2x8x1xf32> to vector<2x8x128xf32>
    %85 = arith.cmpf oeq, %68, %84 : vector<2x8x128xf32>
    %86 = arith.extui %85 : vector<2x8x128xi1> to vector<2x8x128xi32>
    %87 = arith.sitofp %86 : vector<2x8x128xi32> to vector<2x8x128xf32>
    %cst_23 = arith.constant dense<0.000000e+00> : vector<2x128xf32>
    %88 = vector.multi_reduction <add>, %87, %cst_23 [1] : vector<2x8x128xf32> to vector<2x128xf32>
    %89 = vector.shape_cast %88 : vector<2x128xf32> to vector<2x1x128xf32>
    %cst_24 = arith.constant -1.000000e+00 : f32
    %90 = vector.broadcast %cst_24 : f32 to vector<2x1x128xf32>
    %cst_25 = arith.constant 3.000000e-01 : f32
    %91 = vector.broadcast %cst_25 : f32 to vector<2x1x128xf32>
    %92 = arith.cmpf olt, %70, %91 : vector<2x1x128xf32>
    %cst_26 = arith.constant 0.000000e+00 : f32
    %93 = vector.broadcast %cst_26 : f32 to vector<2x1x128xf32>
    %94 = arith.select %92, %93, %90 : vector<2x1x128xi1>, vector<2x1x128xf32>
    %cst_27 = arith.constant 0.000000e+00 : f32
    %95 = vector.broadcast %cst_27 : f32 to vector<2x1x128xf32>
    %96 = arith.cmpf ogt, %89, %95 : vector<2x1x128xf32>
    %cst_28 = arith.constant 1.000000e+00 : f32
    %97 = vector.broadcast %cst_28 : f32 to vector<2x1x128xf32>
    %98 = arith.select %96, %97, %94 : vector<2x1x128xi1>, vector<2x1x128xf32>
    %cst_29 = arith.constant 0.699999988 : f32
    %99 = vector.broadcast %cst_29 : f32 to vector<2x1x128xf32>
    %100 = arith.cmpf oge, %70, %99 : vector<2x1x128xf32>
    %cst_30 = arith.constant 1.000000e+00 : f32
    %101 = vector.broadcast %cst_30 : f32 to vector<2x1x128xf32>
    %102 = arith.select %100, %101, %98 : vector<2x1x128xi1>, vector<2x1x128xf32>
    %cst_31 = arith.constant -1.000000e+00 : f32
    %103 = vector.shape_cast %16 : vector<1x1x128xi1> to vector<1x1x128xi1>
    %104 = vector.broadcast %103 : vector<1x1x128xi1> to vector<2x1x128xi1>
    %105 = vector.broadcast %cst_31 : f32 to vector<2x1x128xf32>
    %106 = arith.select %104, %102, %105 : vector<2x1x128xi1>, vector<2x1x128xf32>
    %107 = vector.broadcast %77 : vector<2x1x128xi32> to vector<2x8x128xi32>
    %108 = arith.cmpi eq, %71, %107 : vector<2x8x128xi32>
    %109 = arith.extui %108 : vector<2x8x128xi1> to vector<2x8x128xi32>
    %110 = arith.sitofp %109 : vector<2x8x128xi32> to vector<2x8x128xf32>
    %cst_32 = arith.constant dense<0.000000e+00> : vector<2x16x128xf32>
    %111 = tpu.matmul %2, %110, %cst_32 {dimension_numbers = #tpu.dot_dimension_numbers<[2], [1], [1], [2], [0, 0, 0, 1, 1, 2], [0], [0]>} : vector<2x16x8xf32>, vector<2x8x128xf32>, vector<2x16x128xf32> -> vector<2x16x128xf32>
    %112 = vector.extract_strided_slice %111 {offsets = [0, 0, 0], sizes = [2, 1, 128], strides = [1, 1, 1]} : vector<2x16x128xf32> to vector<2x1x128xf32>
    %113 = vector.extract_strided_slice %111 {offsets = [0, 1, 0], sizes = [2, 1, 128], strides = [1, 1, 1]} : vector<2x16x128xf32> to vector<2x1x128xf32>
    %114 = vector.extract_strided_slice %111 {offsets = [0, 2, 0], sizes = [2, 1, 128], strides = [1, 1, 1]} : vector<2x16x128xf32> to vector<2x1x128xf32>
    %115 = vector.extract_strided_slice %111 {offsets = [0, 3, 0], sizes = [2, 1, 128], strides = [1, 1, 1]} : vector<2x16x128xf32> to vector<2x1x128xf32>
    %116 = vector.extract_strided_slice %111 {offsets = [0, 4, 0], sizes = [2, 1, 128], strides = [1, 1, 1]} : vector<2x16x128xf32> to vector<2x1x128xf32>
    %117 = vector.extract_strided_slice %111 {offsets = [0, 5, 0], sizes = [2, 1, 128], strides = [1, 1, 1]} : vector<2x16x128xf32> to vector<2x1x128xf32>
    %118 = vector.extract_strided_slice %111 {offsets = [0, 6, 0], sizes = [2, 1, 128], strides = [1, 1, 1]} : vector<2x16x128xf32> to vector<2x1x128xf32>
    %119 = vector.extract_strided_slice %111 {offsets = [0, 7, 0], sizes = [2, 1, 128], strides = [1, 1, 1]} : vector<2x16x128xf32> to vector<2x1x128xf32>
    %120 = vector.extract_strided_slice %111 {offsets = [0, 8, 0], sizes = [2, 1, 128], strides = [1, 1, 1]} : vector<2x16x128xf32> to vector<2x1x128xf32>
    %121 = vector.extract_strided_slice %111 {offsets = [0, 9, 0], sizes = [2, 1, 128], strides = [1, 1, 1]} : vector<2x16x128xf32> to vector<2x1x128xf32>
    %122 = vector.extract_strided_slice %111 {offsets = [0, 10, 0], sizes = [2, 1, 128], strides = [1, 1, 1]} : vector<2x16x128xf32> to vector<2x1x128xf32>
    %123 = vector.extract_strided_slice %111 {offsets = [0, 11, 0], sizes = [2, 1, 128], strides = [1, 1, 1]} : vector<2x16x128xf32> to vector<2x1x128xf32>
    %124 = arith.subf %114, %112 : vector<2x1x128xf32>
    %cst_33 = arith.constant 1.000000e+00 : f32
    %125 = vector.broadcast %cst_33 : f32 to vector<2x1x128xf32>
    %126 = arith.addf %124, %125 : vector<2x1x128xf32>
    %127 = arith.subf %115, %113 : vector<2x1x128xf32>
    %cst_34 = arith.constant 1.000000e+00 : f32
    %128 = vector.broadcast %cst_34 : f32 to vector<2x1x128xf32>
    %129 = arith.addf %127, %128 : vector<2x1x128xf32>
    %cst_35 = arith.constant 5.000000e-01 : f32
    %130 = vector.broadcast %cst_35 : f32 to vector<2x1x128xf32>
    %131 = arith.mulf %130, %126 : vector<2x1x128xf32>
    %132 = arith.addf %112, %131 : vector<2x1x128xf32>
    %cst_36 = arith.constant 5.000000e-01 : f32
    %133 = vector.broadcast %cst_36 : f32 to vector<2x1x128xf32>
    %134 = arith.mulf %133, %129 : vector<2x1x128xf32>
    %135 = arith.addf %113, %134 : vector<2x1x128xf32>
    %136 = vector.broadcast %11 : vector<1x1x128xf32> to vector<2x1x128xf32>
    %137 = arith.subf %132, %136 : vector<2x1x128xf32>
    %138 = vector.broadcast %7 : vector<1x1x128xf32> to vector<2x1x128xf32>
    %139 = arith.mulf %137, %138 : vector<2x1x128xf32>
    %140 = vector.broadcast %12 : vector<1x1x128xf32> to vector<2x1x128xf32>
    %141 = arith.subf %135, %140 : vector<2x1x128xf32>
    %142 = vector.broadcast %8 : vector<1x1x128xf32> to vector<2x1x128xf32>
    %143 = arith.mulf %141, %142 : vector<2x1x128xf32>
    %144 = math.log %126 : vector<2x1x128xf32>
    %145 = vector.broadcast %9 : vector<1x1x128xf32> to vector<2x1x128xf32>
    %146 = arith.subf %144, %145 : vector<2x1x128xf32>
    %147 = math.log %129 : vector<2x1x128xf32>
    %148 = vector.broadcast %10 : vector<1x1x128xf32> to vector<2x1x128xf32>
    %149 = arith.subf %147, %148 : vector<2x1x128xf32>
    %150 = arith.addf %116, %118 : vector<2x1x128xf32>
    %cst_37 = arith.constant 5.000000e-01 : f32
    %151 = vector.broadcast %cst_37 : f32 to vector<2x1x128xf32>
    %152 = arith.mulf %151, %150 : vector<2x1x128xf32>
    %153 = arith.addf %117, %119 : vector<2x1x128xf32>
    %cst_38 = arith.constant 5.000000e-01 : f32
    %154 = vector.broadcast %cst_38 : f32 to vector<2x1x128xf32>
    %155 = arith.mulf %154, %153 : vector<2x1x128xf32>
    %156 = arith.subf %118, %116 : vector<2x1x128xf32>
    %157 = arith.mulf %156, %156 : vector<2x1x128xf32>
    %158 = arith.subf %119, %117 : vector<2x1x128xf32>
    %159 = arith.mulf %158, %158 : vector<2x1x128xf32>
    %160 = arith.addf %157, %159 : vector<2x1x128xf32>
    %161 = math.sqrt %160 : vector<2x1x128xf32>
    %162 = arith.subf %122, %120 : vector<2x1x128xf32>
    %163 = arith.mulf %162, %162 : vector<2x1x128xf32>
    %164 = arith.subf %123, %121 : vector<2x1x128xf32>
    %165 = arith.mulf %164, %164 : vector<2x1x128xf32>
    %166 = arith.addf %163, %165 : vector<2x1x128xf32>
    %167 = math.sqrt %166 : vector<2x1x128xf32>
    %168 = vector.broadcast %11 : vector<1x1x128xf32> to vector<2x1x128xf32>
    %169 = arith.subf %152, %168 : vector<2x1x128xf32>
    %170 = vector.broadcast %7 : vector<1x1x128xf32> to vector<2x1x128xf32>
    %171 = arith.mulf %169, %170 : vector<2x1x128xf32>
    %172 = vector.broadcast %12 : vector<1x1x128xf32> to vector<2x1x128xf32>
    %173 = arith.subf %155, %172 : vector<2x1x128xf32>
    %174 = vector.broadcast %8 : vector<1x1x128xf32> to vector<2x1x128xf32>
    %175 = arith.mulf %173, %174 : vector<2x1x128xf32>
    %cst_39 = arith.constant 9.99999997E-7 : f32
    %176 = vector.broadcast %cst_39 : f32 to vector<2x1x128xf32>
    %177 = arith.maximumf %161, %176 : vector<2x1x128xf32>
    %178 = math.log %177 : vector<2x1x128xf32>
    %179 = vector.broadcast %9 : vector<1x1x128xf32> to vector<2x1x128xf32>
    %180 = arith.subf %178, %179 : vector<2x1x128xf32>
    %cst_40 = arith.constant 9.99999997E-7 : f32
    %181 = vector.broadcast %cst_40 : f32 to vector<2x1x128xf32>
    %182 = arith.maximumf %167, %181 : vector<2x1x128xf32>
    %183 = math.log %182 : vector<2x1x128xf32>
    %184 = vector.broadcast %10 : vector<1x1x128xf32> to vector<2x1x128xf32>
    %185 = arith.subf %183, %184 : vector<2x1x128xf32>
    %186 = arith.subf %119, %117 : vector<2x1x128xf32>
    %cst_41 = arith.constant 9.99999997E-7 : f32
    %187 = vector.broadcast %cst_41 : f32 to vector<2x1x128xf32>
    %188 = arith.addf %161, %187 : vector<2x1x128xf32>
    %189 = tpu.reciprocal %188 {approx = true} : vector<2x1x128xf32> -> vector<2x1x128xf32>
    %190 = arith.mulf %186, %189 : vector<2x1x128xf32>
    %c0_42 = arith.constant 0 : index
    %c0_43 = arith.constant 0 : index
    %c0_44 = arith.constant 0 : index
    %191 = vector.load %arg3[%c0_42, %c0_43, %c0_44] : memref<2x16x128xf32, #tpu.memory_space<vmem>>, vector<2x1x128xf32>
    tpu.vector_store %arg3[%c0_42, %c0_43, %c0_44], %106 {strides = array<i32>} : memref<2x16x128xf32, #tpu.memory_space<vmem>>, vector<2x1x128xf32>,
    %cst_45 = arith.constant 0.000000e+00 : f32
    %192 = vector.shape_cast %16 : vector<1x1x128xi1> to vector<1x1x128xi1>
    %193 = vector.broadcast %192 : vector<1x1x128xi1> to vector<2x1x128xi1>
    %194 = vector.broadcast %cst_45 : f32 to vector<2x1x128xf32>
    %195 = arith.select %193, %139, %194 : vector<2x1x128xi1>, vector<2x1x128xf32>
    %c0_46 = arith.constant 0 : index
    %c1 = arith.constant 1 : index
    %c0_47 = arith.constant 0 : index
    %196 = vector.load %arg3[%c0_46, %c1, %c0_47] : memref<2x16x128xf32, #tpu.memory_space<vmem>>, vector<2x1x128xf32>
    tpu.vector_store %arg3[%c0_46, %c1, %c0_47], %195 {strides = array<i32>} : memref<2x16x128xf32, #tpu.memory_space<vmem>>, vector<2x1x128xf32>,
    %cst_48 = arith.constant 0.000000e+00 : f32
    %197 = vector.shape_cast %16 : vector<1x1x128xi1> to vector<1x1x128xi1>
    %198 = vector.broadcast %197 : vector<1x1x128xi1> to vector<2x1x128xi1>
    %199 = vector.broadcast %cst_48 : f32 to vector<2x1x128xf32>
    %200 = arith.select %198, %143, %199 : vector<2x1x128xi1>, vector<2x1x128xf32>
    %c0_49 = arith.constant 0 : index
    %c2 = arith.constant 2 : index
    %c0_50 = arith.constant 0 : index
    %201 = vector.load %arg3[%c0_49, %c2, %c0_50] : memref<2x16x128xf32, #tpu.memory_space<vmem>>, vector<2x1x128xf32>
    tpu.vector_store %arg3[%c0_49, %c2, %c0_50], %200 {strides = array<i32>} : memref<2x16x128xf32, #tpu.memory_space<vmem>>, vector<2x1x128xf32>,
    %cst_51 = arith.constant 0.000000e+00 : f32
    %202 = vector.shape_cast %16 : vector<1x1x128xi1> to vector<1x1x128xi1>
    %203 = vector.broadcast %202 : vector<1x1x128xi1> to vector<2x1x128xi1>
    %204 = vector.broadcast %cst_51 : f32 to vector<2x1x128xf32>
    %205 = arith.select %203, %146, %204 : vector<2x1x128xi1>, vector<2x1x128xf32>
    %c0_52 = arith.constant 0 : index
    %c3 = arith.constant 3 : index
    %c0_53 = arith.constant 0 : index
    %206 = vector.load %arg3[%c0_52, %c3, %c0_53] : memref<2x16x128xf32, #tpu.memory_space<vmem>>, vector<2x1x128xf32>
    tpu.vector_store %arg3[%c0_52, %c3, %c0_53], %205 {strides = array<i32>} : memref<2x16x128xf32, #tpu.memory_space<vmem>>, vector<2x1x128xf32>,
    %cst_54 = arith.constant 0.000000e+00 : f32
    %207 = vector.shape_cast %16 : vector<1x1x128xi1> to vector<1x1x128xi1>
    %208 = vector.broadcast %207 : vector<1x1x128xi1> to vector<2x1x128xi1>
    %209 = vector.broadcast %cst_54 : f32 to vector<2x1x128xf32>
    %210 = arith.select %208, %149, %209 : vector<2x1x128xi1>, vector<2x1x128xf32>
    %c0_55 = arith.constant 0 : index
    %c4 = arith.constant 4 : index
    %c0_56 = arith.constant 0 : index
    %211 = vector.load %arg3[%c0_55, %c4, %c0_56] : memref<2x16x128xf32, #tpu.memory_space<vmem>>, vector<2x1x128xf32>
    tpu.vector_store %arg3[%c0_55, %c4, %c0_56], %210 {strides = array<i32>} : memref<2x16x128xf32, #tpu.memory_space<vmem>>, vector<2x1x128xf32>,
    %cst_57 = arith.constant 0.000000e+00 : f32
    %212 = vector.shape_cast %16 : vector<1x1x128xi1> to vector<1x1x128xi1>
    %213 = vector.broadcast %212 : vector<1x1x128xi1> to vector<2x1x128xi1>
    %214 = vector.broadcast %cst_57 : f32 to vector<2x1x128xf32>
    %215 = arith.select %213, %171, %214 : vector<2x1x128xi1>, vector<2x1x128xf32>
    %c0_58 = arith.constant 0 : index
    %c5 = arith.constant 5 : index
    %c0_59 = arith.constant 0 : index
    %216 = vector.load %arg3[%c0_58, %c5, %c0_59] : memref<2x16x128xf32, #tpu.memory_space<vmem>>, vector<2x1x128xf32>
    tpu.vector_store %arg3[%c0_58, %c5, %c0_59], %215 {strides = array<i32>} : memref<2x16x128xf32, #tpu.memory_space<vmem>>, vector<2x1x128xf32>,
    %cst_60 = arith.constant 0.000000e+00 : f32
    %217 = vector.shape_cast %16 : vector<1x1x128xi1> to vector<1x1x128xi1>
    %218 = vector.broadcast %217 : vector<1x1x128xi1> to vector<2x1x128xi1>
    %219 = vector.broadcast %cst_60 : f32 to vector<2x1x128xf32>
    %220 = arith.select %218, %175, %219 : vector<2x1x128xi1>, vector<2x1x128xf32>
    %c0_61 = arith.constant 0 : index
    %c6 = arith.constant 6 : index
    %c0_62 = arith.constant 0 : index
    %221 = vector.load %arg3[%c0_61, %c6, %c0_62] : memref<2x16x128xf32, #tpu.memory_space<vmem>>, vector<2x1x128xf32>
    tpu.vector_store %arg3[%c0_61, %c6, %c0_62], %220 {strides = array<i32>} : memref<2x16x128xf32, #tpu.memory_space<vmem>>, vector<2x1x128xf32>,
    %cst_63 = arith.constant 0.000000e+00 : f32
    %222 = vector.shape_cast %16 : vector<1x1x128xi1> to vector<1x1x128xi1>
    %223 = vector.broadcast %222 : vector<1x1x128xi1> to vector<2x1x128xi1>
    %224 = vector.broadcast %cst_63 : f32 to vector<2x1x128xf32>
    %225 = arith.select %223, %180, %224 : vector<2x1x128xi1>, vector<2x1x128xf32>
    %c0_64 = arith.constant 0 : index
    %c7 = arith.constant 7 : index
    %c0_65 = arith.constant 0 : index
    %226 = vector.load %arg3[%c0_64, %c7, %c0_65] : memref<2x16x128xf32, #tpu.memory_space<vmem>>, vector<2x1x128xf32>
    tpu.vector_store %arg3[%c0_64, %c7, %c0_65], %225 {strides = array<i32>} : memref<2x16x128xf32, #tpu.memory_space<vmem>>, vector<2x1x128xf32>,
    %cst_66 = arith.constant 0.000000e+00 : f32
    %227 = vector.shape_cast %16 : vector<1x1x128xi1> to vector<1x1x128xi1>
    %228 = vector.broadcast %227 : vector<1x1x128xi1> to vector<2x1x128xi1>
    %229 = vector.broadcast %cst_66 : f32 to vector<2x1x128xf32>
    %230 = arith.select %228, %185, %229 : vector<2x1x128xi1>, vector<2x1x128xf32>
    %c0_67 = arith.constant 0 : index
    %c8 = arith.constant 8 : index
    %c0_68 = arith.constant 0 : index
    %231 = vector.load %arg3[%c0_67, %c8, %c0_68] : memref<2x16x128xf32, #tpu.memory_space<vmem>>, vector<2x1x128xf32>
    tpu.vector_store %arg3[%c0_67, %c8, %c0_68], %230 {strides = array<i32>} : memref<2x16x128xf32, #tpu.memory_space<vmem>>, vector<2x1x128xf32>,
    %cst_69 = arith.constant 0.000000e+00 : f32
    %232 = vector.shape_cast %16 : vector<1x1x128xi1> to vector<1x1x128xi1>
    %233 = vector.broadcast %232 : vector<1x1x128xi1> to vector<2x1x128xi1>
    %234 = vector.broadcast %cst_69 : f32 to vector<2x1x128xf32>
    %235 = arith.select %233, %190, %234 : vector<2x1x128xi1>, vector<2x1x128xf32>
    %c0_70 = arith.constant 0 : index
    %c9 = arith.constant 9 : index
    %c0_71 = arith.constant 0 : index
    %236 = vector.load %arg3[%c0_70, %c9, %c0_71] : memref<2x16x128xf32, #tpu.memory_space<vmem>>, vector<2x1x128xf32>
    tpu.vector_store %arg3[%c0_70, %c9, %c0_71], %235 {strides = array<i32>} : memref<2x16x128xf32, #tpu.memory_space<vmem>>, vector<2x1x128xf32>,
    %cst_72 = arith.constant 0.000000e+00 : f32
    %237 = vector.broadcast %cst_72 : f32 to vector<2x6x128xf32>
    %c0_73 = arith.constant 0 : index
    %c10 = arith.constant 10 : index
    %c0_74 = arith.constant 0 : index
    %238 = vector.load %arg3[%c0_73, %c10, %c0_74] : memref<2x16x128xf32, #tpu.memory_space<vmem>>, vector<2x6x128xf32>
    tpu.vector_store %arg3[%c0_73, %c10, %c0_74], %237 {strides = array<i32>} : memref<2x16x128xf32, #tpu.memory_space<vmem>>, vector<2x6x128xf32>,
    return
  }
}

</mosaic_0001>

<llo_original>
// kernel: tpu_custom_call.1
$region0: #{tpu_custom_call.1}
  #allocation0 [shape = 'u32[]', space=smem, size = 0x4, offset = 0x4, fixed_abs, tag = 'smem constant byte address 0x4 - core index']
  #allocation1 [shape = 'u32[144,128]{1,0:T(1,128)}', space=vmem, size = 0x12000, scoped, tag = 'internal scratch']
  %s0 = inlined_call_operand.vmem [shape: f32[1,16,128], index: 0, kind: input, shape index: {}]
  %s1 = inlined_call_operand.vmem [shape: f32[2,8,5], index: 1, kind: input, shape index: {}]
  %s2 = inlined_call_operand.vmem [shape: f32[2,16,8], index: 2, kind: input, shape index: {}]
  %s3 = inlined_call_operand.hbm [shape: f32[2,16,128], index: 3, kind: output, shape index: {}]
  %s4 = sld [smem:[#allocation0]]
  $region22: #{tpu_custom_call.1} parent=0
    _
  %s6 = ssub.s32 1, %s4
  %s7 = scalar_select 0, %s6, %s4
  $region1: #{tpu_custom_call.1} parent=0
    #allocation2 [shape = 'u8[16384]{0}', space=vmem, size = 0x4000, scoped, tag = 'output window, operand 0, single buffered']
    #allocation3 [shape = 's32[1]{0}', space=sflag, size = 0x4, scoped, tag = 'scoped memory for tpu_custom_call.1']
    %8 = vsyncpa [#allocation3], 0
    // Predicated region
    $region2: #{tpu_custom_call.1} parent=1 // pred_check
      _
    $region3: #{tpu_custom_call.1} parent=1 // pred_check_branch
      %10 = sbr.rel (0) target = $region5
    $region4: #{tpu_custom_call.1} parent=1 // pred_region
      _
    $region5: #{tpu_custom_call.1} parent=1 // pred_fallthru
      _
    // Predicated region
    $region6: #{tpu_custom_call.1} parent=1 // pred_check
      _
    $region7: #{tpu_custom_call.1} parent=1 // pred_check_branch
      %12 = sbr.rel (0) target = $region9
    $region8: #{tpu_custom_call.1} parent=1 // pred_region
      _
    $region9: #{tpu_custom_call.1} parent=1 // pred_fallthru
      _
    // Predicated region
    $region10: #{tpu_custom_call.1} parent=1 // pred_check
      _
    $region11: #{tpu_custom_call.1} parent=1 // pred_check_branch
      %14 = sbr.rel (0) target = $region13
    $region12: #{tpu_custom_call.1} parent=1 // pred_region
      _
    $region13: #{tpu_custom_call.1} parent=1 // pred_fallthru
      _
    %v15 = vld [vmem:[%s0] sm:$0xff]
    %v16 = vld [vmem:[%s0 + $0x8] sm:$0xff]
    %v17 = vld [vmem:[%s1] sm:$0xff]
    %v18 = vld [vmem:[%s1 + $0x8] sm:$0xff]
    %v19 = vld [vmem:[%s2] sm:$0xff]
    %v20 = vld [vmem:[%s2 + $0x8] sm:$0xff]
    %v21 = vld [vmem:[%s2 + $0x10] sm:$0xff]
    %v22 = vld [vmem:[%s2 + $0x18] sm:$0xff]
    %vm23 = vcmp.gt.f32.partialorder %v16, 0.0
    %26 = vrot.lane.b32.xlu0 %v17, 2
    %v27 = vpop.permute.xlu0 %26
    %28 = vrot.lane.b32.xlu0 %v18, 2
    %v29 = vpop.permute.xlu0 %28
    %v32 = vsub.f32 %v17, %v27
    %v33 = vsub.f32 %v18, %v29
    %v34 = vadd.f32 %v32, 1.0
    %v35 = vadd.f32 %v33, 1.0
    %38 = vrot.lane.b32.xlu0 %v34, 127
    %v39 = vpop.permute.xlu0 %38
    %40 = vrot.lane.b32.xlu0 %v35, 127
    %v41 = vpop.permute.xlu0 %40
    %v44 = vmul.f32 %v34, %v39
    %v45 = vmul.f32 %v35, %v41
    %vm46 = vcmp.eq.f32.partialorder %v34, 1.0
    %vm47 = vcmp.eq.f32.partialorder %v35, 1.0
    %v48 = vsel %vm46, 1, 0
    %v49 = vsel %vm47, 1, 0
    %50 = vrot.lane.b32.xlu0 %v48, 127
    %v51 = vpop.permute.xlu0 %50
    %52 = vrot.lane.b32.xlu0 %v49, 127
    %v53 = vpop.permute.xlu0 %52
    %vm54 = vcmp.ne.s32.totalorder %v51, 0
    %vm55 = vcmp.ne.s32.totalorder %v53, 0
    %vm56 = vmand %vm46, %vm54
    %vm57 = vmand %vm47, %vm55
    %v58 = vlaneseq
    %v59 = vshrl.u32 %v58, 7
    %v60 = vsub.s32 2, %v59
    %v61 = vrot.slane %v15, %v60
    %62 = vset.pattern.permute.xlu0 2
    %63 = vperm.xlu0 %62, %v17
    %v64 = vpop.permute.xlu0 %63
    %66 = vset.pattern.permute.xlu0 2
    %67 = vperm.xlu0 %66, %v18
    %v68 = vpop.permute.xlu0 %67
    %v70 = vmin.f32 %v61, %v64
    %v71 = vmin.f32 %v61, %v68
    %v72 = vlaneseq
    %v73 = vshrl.u32 %v72, 7
    %v74 = vsub.s32 0, %v73
    %v75 = vrot.slane %v15, %v74
    %76 = vset.pattern.permute.xlu0 0
    %77 = vperm.xlu0 %76, %v17
    %v78 = vpop.permute.xlu0 %77
    %80 = vset.pattern.permute.xlu0 0
    %81 = vperm.xlu0 %80, %v18
    %v82 = vpop.permute.xlu0 %81
    %v84 = vmax.f32 %v75, %v78
    %v85 = vmax.f32 %v75, %v82
    %v86 = vsub.f32 %v70, %v84
    %v87 = vsub.f32 %v71, %v85
    %v88 = vadd.f32 %v86, 1.0
    %v89 = vadd.f32 %v87, 1.0
    %v90 = vlaneseq
    %v91 = vshrl.u32 %v90, 7
    %v92 = vsub.s32 3, %v91
    %v93 = vrot.slane %v15, %v92
    %94 = vset.pattern.permute.xlu0 3
    %95 = vperm.xlu0 %94, %v17
    %v96 = vpop.permute.xlu0 %95
    %98 = vset.pattern.permute.xlu0 3
    %99 = vperm.xlu0 %98, %v18
    %v100 = vpop.permute.xlu0 %99
    %v102 = vmin.f32 %v93, %v96
    %v103 = vmin.f32 %v93, %v100
    %v104 = vlaneseq
    %v105 = vshrl.u32 %v104, 7
    %v106 = vsub.s32 1, %v105
    %v107 = vrot.slane %v15, %v106
    %108 = vset.pattern.permute.xlu0 1
    %109 = vperm.xlu0 %108, %v17
    %v110 = vpop.permute.xlu0 %109
    %112 = vset.pattern.permute.xlu0 1
    %113 = vperm.xlu0 %112, %v18
    %v114 = vpop.permute.xlu0 %113
    %v116 = vmax.f32 %v107, %v110
    %v117 = vmax.f32 %v107, %v114
    %v118 = vsub.f32 %v102, %v116
    %v119 = vsub.f32 %v103, %v117
    %v120 = vadd.f32 %v118, 1.0
    %v121 = vadd.f32 %v119, 1.0
    %v122 = vmax.f32 %v88, 0.0
    %v123 = vmax.f32 %v89, 0.0
    %v124 = vmax.f32 %v120, 0.0
    %v125 = vmax.f32 %v121, 0.0
    %v126 = vmul.f32 %v122, %v124
    %v127 = vmul.f32 %v123, %v125
    %v128 = vlaneseq
    %v129 = vshrl.u32 %v128, 7
    %v130 = vsub.s32 4, %v129
    %v131 = vrot.slane %v16, %v130
    %133 = vset.pattern.permute.xlu0 2
    %134 = vperm.xlu0 %133, %v44
    %v135 = vpop.permute.xlu0 %134
    %138 = vset.pattern.permute.xlu0 2
    %139 = vperm.xlu0 %138, %v45
    %v140 = vpop.permute.xlu0 %139
    %v142 = vadd.f32 %v131, %v135
    %v143 = vadd.f32 %v131, %v140
    %v144 = vsub.f32 %v142, %v126
    %v145 = vsub.f32 %v143, %v127
    %v146 = vrcp.pop %v144
    %v147 = vmul.f32 %v126, %v146
    %v148 = vrcp.pop %v145
    %v149 = vmul.f32 %v127, %v148
    %v150 = vsel %vm56, 1, 0
    %v151 = vsel %vm57, 1, 0
    %152 = vset.pattern.permute.xlu0 2
    %153 = vperm.xlu0 %152, %v150
    %v154 = vpop.permute.xlu0 %153
    %155 = vset.pattern.permute.xlu0 2
    %156 = vperm.xlu0 %155, %v151
    %v157 = vpop.permute.xlu0 %156
    %vm158 = vcmp.eq.s32.totalorder %v154, 1
    %vm159 = vcmp.eq.s32.totalorder %v157, 1
    %v160 = vsel %vm158, 0.0, %v147
    %v161 = vsel %vm159, 0.0, %v149
    %v162 = vsel %vm23, 1, 0
    %v163 = vlaneseq
    %v164 = vshrl.u32 %v163, 7
    %v165 = vsub.s32 5, %v164
    %v166 = vrot.slane %v162, %v165
    %vm167 = vcmp.eq.s32.totalorder %v166, 1
    %v168 = vsel %vm167, %v160, -1.0
    %v169 = vsel %vm167, %v161, -1.0
    %v170 = vrot.slane %v168, 4
    %v171 = vmax.f32 %v168, %v170
    %v172 = vrot.slane %v171, 2
    %v173 = vmax.f32 %v171, %v172
    %v174 = vrot.slane %v173, 1
    %v175 = vmax.f32 %v173, %v174
    %v176 = vrot.slane %v169, 4
    %v177 = vmax.f32 %v169, %v176
    %v178 = vrot.slane %v177, 2
    %v179 = vmax.f32 %v177, %v178
    %v180 = vrot.slane %v179, 1
    %v181 = vmax.f32 %v179, %v180
    %v182 = vlaneseq
    %v183 = vshrl.u32 %v182, 7
    %vm184 = vcmp.eq.f32.partialorder %v168, %v175
    %vm185 = vcmp.eq.f32.partialorder %v169, %v181
    %v186 = vsel %vm184, %v183, 8
    %v187 = vsel %vm185, %v183, 8
    %v188 = vrot.slane %v186, 4
    %vm189 = vcmp.lt.s32.totalorder %v186, %v188
    %v190 = vsel %vm189, %v186, %v188
    %v191 = vrot.slane %v190, 2
    %vm192 = vcmp.lt.s32.totalorder %v190, %v191
    %v193 = vsel %vm192, %v190, %v191
    %v194 = vrot.slane %v193, 1
    %vm195 = vcmp.lt.s32.totalorder %v193, %v194
    %v196 = vsel %vm195, %v193, %v194
    %v197 = vrot.slane %v187, 4
    %vm198 = vcmp.lt.s32.totalorder %v187, %v197
    %v199 = vsel %vm198, %v187, %v197
    %v200 = vrot.slane %v199, 2
    %vm201 = vcmp.lt.s32.totalorder %v199, %v200
    %v202 = vsel %vm201, %v199, %v200
    %v203 = vrot.slane %v202, 1
    %vm204 = vcmp.lt.s32.totalorder %v202, %v203
    %v205 = vsel %vm204, %v202, %v203
    %206 = vmax.xlane.f32.xlu0 %v168
    %v207 = vpop.xlane.xlu0 %206
    %208 = vmax.xlane.f32.xlu0 %v169
    %v209 = vpop.xlane.xlu0 %208
    %vm210 = vcmp.eq.f32.partialorder %v207, 0.0
    %vm211 = vcmp.eq.f32.partialorder %v209, 0.0
    %v212 = vsel %vm210, 1e-05, %v207
    %v213 = vsel %vm211, 1e-05, %v209
    %vm214 = vcmp.eq.f32.partialorder %v168, %v212
    %vm215 = vcmp.eq.f32.partialorder %v169, %v213
    %v216 = vsel %vm214, 1, 0
    %v217 = vsel %vm215, 1, 0
    %v218 = vcvt.s32.f32 %v216
    %v219 = vcvt.s32.f32 %v217
    %v220 = vrot.slane %v218, 4
    %v221 = vadd.f32 %v218, %v220
    %v222 = vrot.slane %v221, 2
    %v223 = vadd.f32 %v221, %v222
    %v224 = vrot.slane %v223, 1
    %v225 = vadd.f32 %v223, %v224
    %v226 = vrot.slane %v219, 4
    %v227 = vadd.f32 %v219, %v226
    %v228 = vrot.slane %v227, 2
    %v229 = vadd.f32 %v227, %v228
    %v230 = vrot.slane %v229, 1
    %v231 = vadd.f32 %v229, %v230
    %vm232 = vcmp.lt.f32.partialorder %v175, 0.3
    %vm233 = vcmp.lt.f32.partialorder %v181, 0.3
    %v234 = vsel %vm232, 0.0, -1.0
    %v235 = vsel %vm233, 0.0, -1.0
    %vm236 = vcmp.gt.f32.partialorder %v225, 0.0
    %vm237 = vcmp.gt.f32.partialorder %v231, 0.0
    %v238 = vsel %vm236, 1.0, %v234
    %v239 = vsel %vm237, 1.0, %v235
    %vm240 = vcmp.ge.f32.partialorder %v175, 0.7
    %vm241 = vcmp.ge.f32.partialorder %v181, 0.7
    %v242 = vsel %vm240, 1.0, %v238
    %v243 = vsel %vm241, 1.0, %v239
    %vm244 = vcmp.eq.s32.totalorder %v162, 1
    %v245 = vsel %vm244, %v242, -1.0
    %v246 = vsel %vm244, %v243, -1.0
    %vm247 = vcmp.eq.s32.totalorder %v183, %v196
    %vm248 = vcmp.eq.s32.totalorder %v183, %v205
    %v249 = vsel %vm247, 1, 0
    %v250 = vsel %vm248, 1, 0
    %v251 = vcvt.s32.f32 %v249
    %v252 = vcvt.s32.f32 %v250
    %vm253 = vcmask 64512
    %v255 = vsel %vm253, %v19, 0
    %v258 = vsel %vm253, %v20, 0
    %260 = vmatprep.subr.mxu0 0.0
    %261 = vmatpush1.msra.mxu0 %v251
    %262 = vmatprep.subr.mxu0 0.0
    %263 = vmatpush1.msra.mxu0 0.0
    %264 = vmatprep.subr.mxu0 0.0
    %265 = vmatpush1.msra.mxu0 0.0
    %266 = vmatprep.subr.mxu0 0.0
    %267 = vmatpush1.msra.mxu0 0.0
    %268 = vmatprep.subr.mxu0 0.0
    %269 = vmatpush1.msra.mxu0 0.0
    %270 = vmatprep.subr.mxu0 0.0
    %271 = vmatpush1.msra.mxu0 0.0
    %272 = vmatprep.subr.mxu0 0.0
    %273 = vmatpush1.msra.mxu0 0.0
    %274 = vmatprep.subr.mxu0 0.0
    %275 = vmatpush1.msra.mxu0 0.0
    %276 = vmatprep.subr.mxu0 0.0
    %277 = vmatpush1.msra.mxu0 0.0
    %278 = vmatprep.subr.mxu0 0.0
    %279 = vmatpush1.msra.mxu0 0.0
    %280 = vmatprep.subr.mxu0 0.0
    %281 = vmatpush1.msra.mxu0 0.0
    %282 = vmatprep.subr.mxu0 0.0
    %283 = vmatpush1.msra.mxu0 0.0
    %284 = vmatprep.subr.mxu0 0.0
    %285 = vmatpush1.msra.mxu0 0.0
    %286 = vmatprep.subr.mxu0 0.0
    %287 = vmatpush1.msra.mxu0 0.0
    %288 = vmatprep.subr.mxu0 0.0
    %289 = vmatpush1.msra.mxu0 0.0
    %290 = vmatprep.subr.mxu0 0.0
    %291 = vmatpush1.msra.mxu0 0.0
    %292 = vmatprep.subr.mxu0 0.0
    %293 = vmatpush1.msra.mxu0 0.0
    %294 = vmatprep.subr.mxu0 0.0
    %295 = vmatpush1.msra.mxu0 0.0
    %296 = vmatprep.subr.mxu0 0.0
    %297 = vmatpush1.msra.mxu0 0.0
    %298 = vmatprep.subr.mxu0 0.0
    %299 = vmatpush1.msra.mxu0 0.0
    %300 = vmatprep.subr.mxu0 0.0
    %301 = vmatpush1.msra.mxu0 0.0
    %302 = vmatprep.subr.mxu0 0.0
    %303 = vmatpush1.msra.mxu0 0.0
    %304 = vmatprep.subr.mxu0 0.0
    %305 = vmatpush1.msra.mxu0 0.0
    %306 = vmatprep.subr.mxu0 0.0
    %307 = vmatpush1.msra.mxu0 0.0
    %308 = vmatprep.subr.mxu0 0.0
    %309 = vmatpush1.msra.mxu0 0.0
    %310 = vmatprep.subr.mxu0 0.0
    %311 = vmatpush1.msra.mxu0 0.0
    %312 = vmatprep.subr.mxu0 0.0
    %313 = vmatpush1.msra.mxu0 0.0
    %314 = vmatprep.subr.mxu0 0.0
    %315 = vmatpush1.msra.mxu0 0.0
    %316 = vmatprep.subr.mxu0 0.0
    %317 = vmatpush1.msra.mxu0 0.0
    %318 = vmatprep.subr.mxu0 0.0
    %319 = vmatpush1.msra.mxu0 0.0
    %320 = vmatprep.subr.mxu0 0.0
    %321 = vmatpush1.msra.mxu0 0.0
    %322 = vmatprep.subr.mxu0 0.0
    %323 = vmatpush1.msra.mxu0 0.0
    %324 = vmatprep.mubr.f32.mxu0 0.0
    %325 = vmatmul.mubr.f32.gmra.mrb[0].mxu0 %v255
    %v326 = vpop.f32.mrb[0].mxu0
    %v327 = vadd.f32 0.0, %v326
    %v328 = vpop.f32.mrb[0].mxu0
    %329 = vmatprep.mubr.f32.mxu0 0.0
    %330 = vmatmul.mubr.f32.gmra.mrb[0].mxu0 %v258
    %v331 = vpop.f32.mrb[0].mxu0
    %v332 = vadd.f32 0.0, %v331
    %v333 = vpop.f32.mrb[0].mxu0
    %334 = vdwg.mxu0
    %v336 = vsel %vm253, %v21, 0
    %v339 = vsel %vm253, %v22, 0
    %341 = vmatprep.subr.mxu0 0.0
    %342 = vmatpush1.msra.mxu0 %v252
    %343 = vmatprep.subr.mxu0 0.0
    %344 = vmatpush1.msra.mxu0 0.0
    %345 = vmatprep.subr.mxu0 0.0
    %346 = vmatpush1.msra.mxu0 0.0
    %347 = vmatprep.subr.mxu0 0.0
    %348 = vmatpush1.msra.mxu0 0.0
    %349 = vmatprep.subr.mxu0 0.0
    %350 = vmatpush1.msra.mxu0 0.0
    %351 = vmatprep.subr.mxu0 0.0
    %352 = vmatpush1.msra.mxu0 0.0
    %353 = vmatprep.subr.mxu0 0.0
    %354 = vmatpush1.msra.mxu0 0.0
    %355 = vmatprep.subr.mxu0 0.0
    %356 = vmatpush1.msra.mxu0 0.0
    %357 = vmatprep.subr.mxu0 0.0
    %358 = vmatpush1.msra.mxu0 0.0
    %359 = vmatprep.subr.mxu0 0.0
    %360 = vmatpush1.msra.mxu0 0.0
    %361 = vmatprep.subr.mxu0 0.0
    %362 = vmatpush1.msra.mxu0 0.0
    %363 = vmatprep.subr.mxu0 0.0
    %364 = vmatpush1.msra.mxu0 0.0
    %365 = vmatprep.subr.mxu0 0.0
    %366 = vmatpush1.msra.mxu0 0.0
    %367 = vmatprep.subr.mxu0 0.0
    %368 = vmatpush1.msra.mxu0 0.0
    %369 = vmatprep.subr.mxu0 0.0
    %370 = vmatpush1.msra.mxu0 0.0
    %371 = vmatprep.subr.mxu0 0.0
    %372 = vmatpush1.msra.mxu0 0.0
    %373 = vmatprep.subr.mxu0 0.0
    %374 = vmatpush1.msra.mxu0 0.0
    %375 = vmatprep.subr.mxu0 0.0
    %376 = vmatpush1.msra.mxu0 0.0
    %377 = vmatprep.subr.mxu0 0.0
    %378 = vmatpush1.msra.mxu0 0.0
    %379 = vmatprep.subr.mxu0 0.0
    %380 = vmatpush1.msra.mxu0 0.0
    %381 = vmatprep.subr.mxu0 0.0
    %382 = vmatpush1.msra.mxu0 0.0
    %383 = vmatprep.subr.mxu0 0.0
    %384 = vmatpush1.msra.mxu0 0.0
    %385 = vmatprep.subr.mxu0 0.0
    %386 = vmatpush1.msra.mxu0 0.0
    %387 = vmatprep.subr.mxu0 0.0
    %388 = vmatpush1.msra.mxu0 0.0
    %389 = vmatprep.subr.mxu0 0.0
    %390 = vmatpush1.msra.mxu0 0.0
    %391 = vmatprep.subr.mxu0 0.0
    %392 = vmatpush1.msra.mxu0 0.0
    %393 = vmatprep.subr.mxu0 0.0
    %394 = vmatpush1.msra.mxu0 0.0
    %395 = vmatprep.subr.mxu0 0.0
    %396 = vmatpush1.msra.mxu0 0.0
    %397 = vmatprep.subr.mxu0 0.0
    %398 = vmatpush1.msra.mxu0 0.0
    %399 = vmatprep.subr.mxu0 0.0
    %400 = vmatpush1.msra.mxu0 0.0
    %401 = vmatprep.subr.mxu0 0.0
    %402 = vmatpush1.msra.mxu0 0.0
    %403 = vmatprep.subr.mxu0 0.0
    %404 = vmatpush1.msra.mxu0 0.0
    %405 = vmatprep.mubr.f32.mxu0 0.0
    %406 = vmatmul.mubr.f32.gmra.mrb[0].mxu0 %v336
    %v407 = vpop.f32.mrb[0].mxu0
    %v408 = vadd.f32 0.0, %v407
    %v409 = vpop.f32.mrb[0].mxu0
    %410 = vmatprep.mubr.f32.mxu0 0.0
    %411 = vmatmul.mubr.f32.gmra.mrb[0].mxu0 %v339
    %v412 = vpop.f32.mrb[0].mxu0
    %v413 = vadd.f32 0.0, %v412
    %v414 = vpop.f32.mrb[0].mxu0
    %415 = vdwg.mxu0
    %v418 = vrot.slane %v327, 6
    %v419 = vrot.slane %v408, 6
    %v422 = vsub.f32 %v327, %v418
    %v423 = vsub.f32 %v408, %v419
    %v424 = vadd.f32 %v422, 1.0
    %v425 = vadd.f32 %v423, 1.0
    %v426 = vmul.f32 %v424, 0.5
    %v427 = vmul.f32 %v425, 0.5
    %v430 = vrot.slane %v426, 2
    %v431 = vrot.slane %v427, 2
    %v434 = vadd.f32 %v327, %v430
    %v435 = vadd.f32 %v408, %v431
    %v437 = vrot.slane %v16, 2
    %v439 = vsub.f32 %v434, %v437
    %v440 = vsub.f32 %v435, %v437
    %v442 = vrot.slane %v15, 6
    %v444 = vmul.f32 %v439, %v442
    %v445 = vmul.f32 %v440, %v442
    %v446 = vlog2.pop %v424
    %v447 = vmul.f32 %v446, 0.6931472
    %v448 = vlog2.pop %v425
    %v449 = vmul.f32 %v448, 0.6931472
    %v450 = vrot.slane %v16, 6
    %v452 = vsub.f32 %v447, %v450
    %v453 = vsub.f32 %v449, %v450
    %v454 = vrot.slane %v327, 2
    %v455 = vrot.slane %v408, 2
    %v458 = vadd.f32 %v327, %v454
    %v459 = vadd.f32 %v408, %v455
    %v460 = vmul.f32 %v458, 0.5
    %v461 = vmul.f32 %v459, 0.5
    %v462 = vmul.f32 %v422, %v422
    %v463 = vmul.f32 %v423, %v423
    %v466 = vrot.slane %v462, 1
    %v467 = vrot.slane %v463, 1
    %v470 = vadd.f32 %v462, %v466
    %v471 = vadd.f32 %v463, %v467
    %v472 = vrsqrt.pop %v470
    %v473 = vmul.f32 %v470, %v472
    %vm474 = vcmp.eq.f32.partialorder %v470, inf
    %v475 = vsel %vm474, %v470, %v473
    %vm476 = vcmp.eq.f32.partialorder %v470, 0.0
    %v477 = vand.u32 %v470, 2147483648
    %v478 = vsel %vm476, %v477, %v475
    %v479 = vrsqrt.pop %v471
    %v480 = vmul.f32 %v471, %v479
    %vm481 = vcmp.eq.f32.partialorder %v471, inf
    %v482 = vsel %vm481, %v471, %v480
    %vm483 = vcmp.eq.f32.partialorder %v471, 0.0
    %v484 = vand.u32 %v471, 2147483648
    %v485 = vsel %vm483, %v484, %v482
    %v488 = vrot.slane %v332, 6
    %v489 = vrot.slane %v413, 6
    %v492 = vsub.f32 %v332, %v488
    %v493 = vsub.f32 %v413, %v489
    %v494 = vmul.f32 %v492, %v492
    %v495 = vmul.f32 %v493, %v493
    %v498 = vrot.slane %v494, 1
    %v499 = vrot.slane %v495, 1
    %v502 = vadd.f32 %v494, %v498
    %v503 = vadd.f32 %v495, %v499
    %v504 = vrsqrt.pop %v502
    %v505 = vmul.f32 %v502, %v504
    %vm506 = vcmp.eq.f32.partialorder %v502, inf
    %v507 = vsel %vm506, %v502, %v505
    %vm508 = vcmp.eq.f32.partialorder %v502, 0.0
    %v509 = vand.u32 %v502, 2147483648
    %v510 = vsel %vm508, %v509, %v507
    %v511 = vrsqrt.pop %v503
    %v512 = vmul.f32 %v503, %v511
    %vm513 = vcmp.eq.f32.partialorder %v503, inf
    %v514 = vsel %vm513, %v503, %v512
    %vm515 = vcmp.eq.f32.partialorder %v503, 0.0
    %v516 = vand.u32 %v503, 2147483648
    %v517 = vsel %vm515, %v516, %v514
    %v518 = vsub.f32 %v460, %v450
    %v519 = vsub.f32 %v461, %v450
    %v520 = vrot.slane %v15, 2
    %v522 = vmul.f32 %v518, %v520
    %v523 = vmul.f32 %v519, %v520
    %v524 = vmax.f32 %v478, 1e-06
    %v525 = vmax.f32 %v485, 1e-06
    %v526 = vlog2.pop %v524
    %v527 = vmul.f32 %v526, 0.6931472
    %v528 = vlog2.pop %v525
    %v529 = vmul.f32 %v528, 0.6931472
    %v530 = vsub.f32 %v527, %v437
    %v531 = vsub.f32 %v529, %v437
    %v532 = vmax.f32 %v510, 1e-06
    %v533 = vmax.f32 %v517, 1e-06
    %v534 = vlog2.pop %v532
    %v535 = vmul.f32 %v534, 0.6931472
    %v536 = vlog2.pop %v533
    %v537 = vmul.f32 %v536, 0.6931472
    %v538 = vrot.slane %v16, 7
    %v540 = vsub.f32 %v535, %v538
    %v541 = vsub.f32 %v537, %v538
    %v542 = vadd.f32 %v478, 1e-06
    %v543 = vadd.f32 %v485, 1e-06
    %v544 = vrcp.pop %v542
    %v545 = vrcp.pop %v543
    %v548 = vrot.slane %v544, 7
    %v549 = vrot.slane %v545, 7
    %v552 = vmul.f32 %v422, %v548
    %v553 = vmul.f32 %v423, %v549
    %554 = vst [vmem:[#allocation2 - $0x5] sm:$0x20] %v245
    %555 = vst [vmem:[#allocation2 + $0xb] sm:$0x20] %v246
    %v558 = vrot.slane %v444, 3
    %v559 = vrot.slane %v445, 3
    %v562 = vsel %vm244, %v558, 0.0
    %v563 = vsel %vm244, %v559, 0.0
    %564 = vst [vmem:[#allocation2 - $0x4] sm:$0x20] %v562
    %565 = vst [vmem:[#allocation2 + $0xc] sm:$0x20] %v563
    %v566 = vrot.slane %v444, 4
    %v567 = vrot.slane %v445, 4
    %v570 = vsel %vm244, %v566, 0.0
    %v571 = vsel %vm244, %v567, 0.0
    %572 = vst [vmem:[#allocation2 - $0x3] sm:$0x20] %v570
    %573 = vst [vmem:[#allocation2 + $0xd] sm:$0x20] %v571
    %v576 = vrot.slane %v452, 5
    %v577 = vrot.slane %v453, 5
    %v580 = vsel %vm244, %v576, 0.0
    %v581 = vsel %vm244, %v577, 0.0
    %582 = vst [vmem:[#allocation2 - $0x2] sm:$0x20] %v580
    %583 = vst [vmem:[#allocation2 + $0xe] sm:$0x20] %v581
    %v584 = vrot.slane %v452, 6
    %v585 = vrot.slane %v453, 6
    %v588 = vsel %vm244, %v584, 0.0
    %v589 = vsel %vm244, %v585, 0.0
    %590 = vst [vmem:[#allocation2 - $0x1] sm:$0x20] %v588
    %591 = vst [vmem:[#allocation2 + $0xf] sm:$0x20] %v589
    %v594 = vrot.slane %v522, 7
    %v595 = vrot.slane %v523, 7
    %v598 = vsel %vm244, %v594, 0.0
    %v599 = vsel %vm244, %v595, 0.0
    %600 = vst [vmem:[#allocation2] sm:$0x20] %v598
    %601 = vst [vmem:[#allocation2 + $0x10] sm:$0x20] %v599
    %v602 = vsel %vm244, %v522, 0.0
    %v603 = vsel %vm244, %v523, 0.0
    %604 = vst [vmem:[#allocation2 + $0x1] sm:$0x20] %v602
    %605 = vst [vmem:[#allocation2 + $0x11] sm:$0x20] %v603
    %v608 = vrot.slane %v530, 1
    %v609 = vrot.slane %v531, 1
    %v612 = vsel %vm244, %v608, 0.0
    %v613 = vsel %vm244, %v609, 0.0
    %614 = vst [vmem:[#allocation2 + $0x2] sm:$0x20] %v612
    %615 = vst [vmem:[#allocation2 + $0x12] sm:$0x20] %v613
    %v618 = vrot.slane %v540, 5
    %v619 = vrot.slane %v541, 5
    %v622 = vsel %vm244, %v618, 0.0
    %v623 = vsel %vm244, %v619, 0.0
    %624 = vst [vmem:[#allocation2 + $0x3] sm:$0x20] %v622
    %625 = vst [vmem:[#allocation2 + $0x13] sm:$0x20] %v623
    %v628 = vrot.slane %v552, 2
    %v629 = vrot.slane %v553, 2
    %v632 = vsel %vm244, %v628, 0.0
    %v633 = vsel %vm244, %v629, 0.0
    %634 = vst [vmem:[#allocation2 + $0x4] sm:$0x20] %v632
    %635 = vst [vmem:[#allocation2 + $0x14] sm:$0x20] %v633
    %636 = vst [vmem:[#allocation2 + $0xa] sm:$0x3f] 0.0
    %637 = vst [vmem:[#allocation2 + $0x1a] sm:$0x3f] 0.0
    // Predicated region
    $region14: #{tpu_custom_call.1} parent=1 // pred_check
      _
    $region15: #{tpu_custom_call.1} parent=1 // pred_check_branch
      %639 = sbr.rel (0) target = $region17
    $region16: #{tpu_custom_call.1} parent=1 // pred_region
      %s641 = ssub.s32 512, 512
      %642 = vsyncadd [#allocation3], %s641
      %s643 = sshll.u32 [#allocation2], 4
      %s644 = int_to_ptr.vmem [resolvable:$true] %s643
      %649 = dma.vmem_to_hbm [thread:$0]  %s644, 512, %s3, [#allocation3], 128, 128, 8
    $region17: #{tpu_custom_call.1} parent=1 // pred_fallthru
      _
    // Predicated region
    $region18: #{tpu_custom_call.1} parent=1 // pred_check
      _
    $region19: #{tpu_custom_call.1} parent=1 // pred_check_branch
      %651 = sbr.rel (0) target = $region21
    $region20: #{tpu_custom_call.1} parent=1 // pred_region
      %652 = dma.done [#allocation3], 512
    $region21: #{tpu_custom_call.1} parent=1 // pred_fallthru
      _
    %653 = vsyncpa [#allocation3], 1

</llo_original>
